<compile_context>
chip_gen: v7x
topology: tpu7x:2x2x1
jax: 0.10.0
libtpu: 0.0.40
codegen_flags: <defaults>
</compile_context>

<pallas_src>
import math
from functools import lru_cache

import jax
import jax.numpy as jnp
from jax.experimental import pallas as pl
from jax.experimental.pallas import tpu as pltpu


_FAST_PATH_BYTES = 2 << 20     # below this, skip Pallas and let XLA fuse the add


# ---------------------------------------------------------------------------
# Kernel: one vreg-wide broadcast add.
#   x_ref: (R, L)
#   b_ref: (1, L)  -> broadcast over rows   (2D path)
#          (R, 1)  -> broadcast over lanes  (4D / channel path)
# ---------------------------------------------------------------------------
def _addbias_kernel(x_ref, b_ref, o_ref):
    o_ref[...] = x_ref[...] + b_ref[...]


# ---------------------------------------------------------------------------
# Per-generation tile / VMEM budgets.
# ---------------------------------------------------------------------------
@lru_cache(maxsize=None)
def _hw_params():
    target, vmem_limit = 4 << 20, 32 << 20          # safe fallback everywhere
    try:
        info = pltpu.get_tpu_info()
        cap = getattr(info, "vmem_capacity_bytes", None)
        if cap is not None:
            if cap >= (100 << 20):                  # v5e / v6e: 128 MiB VMEM
                target, vmem_limit = 8 << 20, 64 << 20
            else:                                   # v7x: 64 MiB VMEM per TC
                target, vmem_limit = 6 << 20, 48 << 20
    except Exception:
        pass
    return target, vmem_limit


def _row_align(itemsize):
    # Sub-32-bit dtypes pack along sublanes: f32 -> 8, bf16 -> 16, int8/fp8 -> 32.
    return max(8, 32 // max(int(itemsize), 1))


def _choose_tiles(n_rows, n_cols, itemsize, row_align, target_bytes):
    """Pick (tile_rows, tile_cols) ~ target_bytes of x per grid step, dense layout."""
    row_bytes = n_cols * itemsize
    if n_rows * row_bytes <= target_bytes:
        return n_rows, n_cols                        # whole array in one block
    if row_align * row_bytes <= target_bytes:
        rows = (target_bytes // row_bytes) // row_align * row_align
        rows = max(row_align, rows)
        return min(rows, n_rows), n_cols             # full-width row tiles
    # Very wide rows: tile the lane axis too (multiple of 128).
    tile_rows = row_align if n_rows >= row_align else n_rows
    cols = (target_bytes // max(tile_rows * itemsize, 1)) // 128 * 128
    cols = max(128, cols)
    if cols >= n_cols:
        return tile_rows, n_cols
    return tile_rows, cols


# ---------------------------------------------------------------------------
# Tiled broadcast add over a 2-D view.
# ---------------------------------------------------------------------------
def _tiled_broadcast_add(x2d, bias2d, tile_rows, tile_cols, vmem_limit):
    n_rows, n_cols = x2d.shape
    grid = (pl.cdiv(n_rows, tile_rows), pl.cdiv(n_cols, tile_cols))

    if bias2d.shape[0] == 1:
        # Row-vector bias (1, n_cols): broadcast over rows, sliced along lanes.
        bias_spec = pl.BlockSpec((1, tile_cols), lambda i, j: (0, j))
    else:
        # Column bias (n_rows, 1): broadcast over lanes, sliced along rows.
        bias_spec = pl.BlockSpec((tile_rows, 1), lambda i, j: (i, 0))

    return pl.pallas_call(
        _addbias_kernel,
        out_shape=jax.ShapeDtypeStruct((n_rows, n_cols), x2d.dtype),
        grid_spec=pltpu.PrefetchScalarGridSpec(
            num_scalar_prefetch=0,
            grid=grid,
            in_specs=[
                pl.BlockSpec((tile_rows, tile_cols), lambda i, j: (i, j)),
                bias_spec,
            ],
            out_specs=pl.BlockSpec((tile_rows, tile_cols), lambda i, j: (i, j)),
        ),
        compiler_params=pltpu.CompilerParams(
            dimension_semantics=("parallel", "parallel"),
            vmem_limit_bytes=vmem_limit,
        ),
    )(x2d, bias2d)


# ---------------------------------------------------------------------------
# Wrapper (equivalent of AddBias.forward)
# ---------------------------------------------------------------------------
def add_bias(x, bias_param, *, force_pallas=False, target_tile_bytes=None):
    """bias_param has shape (F, 1), matching nn.Parameter(bias.unsqueeze(1))."""
    F = bias_param.shape[0]
    bias = bias_param.reshape(F)

    # Match PyTorch type promotion (e.g. bf16 x + f32 bias -> f32 result).
    out_dtype = jnp.result_type(x.dtype, bias.dtype)
    xb = x.astype(out_dtype)
    bias = bias.astype(out_dtype)
    itemsize = jnp.dtype(out_dtype).itemsize

    if x.ndim not in (2, 4):
        raise ValueError("AddBias only supports 2D or 4D inputs.")

    # Fast path: tiny tensors -> plain JAX add so XLA can fuse it.
    if not force_pallas and x.size * itemsize < _FAST_PATH_BYTES:
        if x.ndim == 2:
            return xb + bias.reshape(1, F)
        return xb + bias.reshape(1, F, 1, 1)

    target, vmem_limit = _hw_params()
    if target_tile_bytes is not None:
        target = int(target_tile_bytes)
    align = _row_align(itemsize)

    if x.ndim == 2:
        N, F_x = x.shape
        assert F_x == F
        # Lane-dense fold: view (N, F) as (N/g, g*F) with g*F % 128 == 0.
        g = 1
        if F % 128 != 0:
            gg = 128 // math.gcd(F, 128)
            if gg > 1 and N % gg == 0 and N // gg >= 1:
                g = gg
        rows, cols = N // g, F * g
        x2 = xb.reshape(rows, cols)                   # row-major -> free view
        b_row = (jnp.tile(bias, (g,)) if g > 1 else bias).reshape(1, cols)
        tile_rows, tile_cols = _choose_tiles(rows, cols, itemsize, align, target)
        out = _tiled_broadcast_add(x2, b_row, tile_rows, tile_cols, vmem_limit)
        return out.reshape(N, F)

    # x.ndim == 4 : NCHW -> (N*C, H*W), bias as full (N*C, 1) column sliced per step.
    N, C, H, W = x.shape
    assert C == F
    rows, cols = N * C, H * W
    x2 = xb.reshape(rows, cols)                       # free view
    b_col = jnp.tile(bias, (N,)).reshape(rows, 1)     # tiny vs x
    tile_rows, tile_cols = _choose_tiles(rows, cols, itemsize, align, target)
    out = _tiled_broadcast_add(x2, b_col, tile_rows, tile_cols, vmem_limit)
    return out.reshape(N, C, H, W)


# ---------------------------------------------------------------------------
# Demo / self-test
# ---------------------------------------------------------------------------
if __name__ == "__main__":
    key = jax.random.PRNGKey(0)
    k1, k2, k3, k4, k5, k6, k7 = jax.random.split(key, 7)

    # ----- 4D case (NCHW), C = 4 channels, forced through the Pallas path -----
    N, C, H, W = 2, 4, 16, 16
    x4 = jax.random.normal(k1, (N, C, H, W), dtype=jnp.float32)
    bias4 = jax.random.normal(k2, (C,), dtype=jnp.float32)
    bias4_param = bias4[:, None]                      # (C, 1)

    out4 = jax.block_until_ready(add_bias(x4, bias4_param, force_pallas=True))
    ref4 = x4 + bias4.reshape(1, C, 1, 1)
    assert jnp.allclose(out4, ref4, atol=1e-6), "4D AddBias mismatch"

    # Fast-path (fused XLA) variant must agree too.
    out4_fast = jax.block_until_ready(add_bias(x4, bias4_param))
    assert jnp.allclose(out4_fast, ref4, atol=1e-6), "4D fast-path mismatch"

    # ----- 2D case (N, F), F = 32, forced through the Pallas path -----
    Nb, Ff = 2, 32
    x2 = jax.random.normal(k3, (Nb, Ff), dtype=jnp.float32)
    bias2 = jax.random.normal(k4, (Ff,), dtype=jnp.float32)
    bias2_param = bias2[:, None]                      # (F, 1)

    out2 = jax.block_until_ready(add_bias(x2, bias2_param, force_pallas=True))
    ref2 = x2 + bias2.reshape(1, Ff)
    assert jnp.allclose(out2, ref2, atol=1e-6), "2D AddBias mismatch"

    # ----- 2D, large enough for auto-Pallas + lane fold (F=96 -> g=4) -----
    Ng, Fg = 8192, 96
    xg = jax.random.normal(k5, (Ng, Fg), dtype=jnp.float32)
    biasg = jax.random.normal(k2, (Fg,), dtype=jnp.float32)
    outg = jax.block_until_ready(add_bias(xg, biasg[:, None]))
    refg = xg + biasg.reshape(1, Fg)
    assert jnp.allclose(outg, refg, atol=1e-6), "lane-folded 2D AddBias mismatch"

    # ----- 2D, multi-step row grid with a partial tail block -----
    Nl, Fl = 4096, 640
    xl = jax.random.normal(k6, (Nl, Fl), dtype=jnp.float32)
    biasl = jax.random.normal(k2, (Fl,), dtype=jnp.float32)
    outl = jax.block_until_ready(add_bias(xl, biasl[:, None]))
    refl = xl + biasl.reshape(1, Fl)
    assert jnp.allclose(outl, refl, atol=1e-6), "tiled 2D AddBias mismatch"

    # ----- 4D with row tiles NOT aligned to C (tests decoupled bias column) -----
    N2, C2, H2, W2 = 4, 3, 32, 32
    x4b = jax.random.normal(k7, (N2, C2, H2, W2), dtype=jnp.float32)
    bias4b = jax.random.normal(k4, (C2,), dtype=jnp.float32)
    out4b = jax.block_until_ready(
        add_bias(x4b, bias4b[:, None], force_pallas=True, target_tile_bytes=32 * 1024))
    ref4b = x4b + bias4b.reshape(1, C2, 1, 1)
    assert jnp.allclose(out4b, ref4b, atol=1e-6), "4D tiled AddBias mismatch"

    # ----- 2D wide-row case exercising column tiling -----
    Nw, Fw = 8, 4096
    xw = jax.random.normal(k1, (Nw, Fw), dtype=jnp.float32)
    biasw = jax.random.normal(k3, (Fw,), dtype=jnp.float32)
    outw = jax.block_until_ready(
        add_bias(xw, biasw[:, None], force_pallas=True, target_tile_bytes=64 * 1024))
    refw = xw + biasw.reshape(1, Fw)
    assert jnp.allclose(outw, refw, atol=1e-6), "col-tiled 2D AddBias mismatch"

    # ----- bf16 x with bf16 bias (stays bf16) -----
    xbf = x2.astype(jnp.bfloat16)
    bbf_param = bias2_param.astype(jnp.bfloat16)
    outbf = jax.block_until_ready(add_bias(xbf, bbf_param, force_pallas=True))
    refbf = xbf + bbf_param.reshape(1, Ff)
    assert outbf.dtype == jnp.bfloat16
    assert jnp.allclose(outbf.astype(jnp.float32), refbf.astype(jnp.float32),
                        atol=1e-2), "bf16 AddBias mismatch"

    print("KERNEL_OK")
</pallas_src>

<mosaic_0001>
module attributes {stable_mosaic.version = 11 : i64} {
  func.func @_addbias_kernel(%arg0: i32, %arg1: i32, %arg2: memref<8x256xf32, #tpu.memory_space<vmem>>, %arg3: memref<8x1xf32, #tpu.memory_space<vmem>>, %arg4: memref<8x256xf32, #tpu.memory_space<vmem>>) attributes {dimension_semantics = [#tpu.dimension_semantics<parallel>, #tpu.dimension_semantics<parallel>], iteration_bounds = array<i64: 1, 1>, scalar_prefetch = 0 : i64, scratch_operands = 0 : i64, tpu.core_type = #tpu.core_type<tc>, window_params = [{transform_indices = @transform_0, window_bounds = array<i64: 8, 256>}, {transform_indices = @transform_1, window_bounds = array<i64: 8, 1>}, {transform_indices = @transform_2, window_bounds = array<i64: 8, 256>}]} {
    %c0 = arith.constant 0 : index
    %c0_0 = arith.constant 0 : index
    %0 = vector.load %arg2[%c0, %c0_0] : memref<8x256xf32, #tpu.memory_space<vmem>>, vector<8x256xf32>
    %c0_1 = arith.constant 0 : index
    %c0_2 = arith.constant 0 : index
    %1 = vector.load %arg3[%c0_1, %c0_2] : memref<8x1xf32, #tpu.memory_space<vmem>>, vector<8x1xf32>
    %2 = vector.broadcast %1 : vector<8x1xf32> to vector<8x256xf32>
    %3 = arith.addf %0, %2 : vector<8x256xf32>
    %c0_3 = arith.constant 0 : index
    %c0_4 = arith.constant 0 : index
    %4 = vector.load %arg4[%c0_3, %c0_4] : memref<8x256xf32, #tpu.memory_space<vmem>>, vector<8x256xf32>
    tpu.vector_store %arg4[%c0_3, %c0_4], %3 {strides = array<i32>} : memref<8x256xf32, #tpu.memory_space<vmem>>, vector<8x256xf32>,
    return
  }
  func.func @transform_0(%arg0: i32, %arg1: i32) -> (i32, i32) {
    %c0_i32 = arith.constant 0 : i32
    return %arg0, %arg1 : i32, i32
  }
  func.func @transform_1(%arg0: i32, %arg1: i32) -> (i32, i32) {
    %c0_i32 = arith.constant 0 : i32
    %c0_i32_0 = arith.constant 0 : i32
    return %arg0, %c0_i32 : i32, i32
  }
  func.func @transform_2(%arg0: i32, %arg1: i32) -> (i32, i32) {
    %c0_i32 = arith.constant 0 : i32
    return %arg0, %arg1 : i32, i32
  }
}

</mosaic_0001>

<llo_original>
// kernel: tpu_custom_call.1
$region0: #{tpu_custom_call.1}
  #allocation0 [shape = 'u32[]', space=smem, size = 0x4, offset = 0x4, fixed_abs, tag = 'smem constant byte address 0x4 - core index']
  #allocation1 [shape = 'u32[144,128]{1,0:T(1,128)}', space=vmem, size = 0x12000, scoped, tag = 'internal scratch']
  %s0 = inlined_call_operand.hbm [shape: f32[8,256], index: 0, kind: input, shape index: {}]
  %s1 = inlined_call_operand.vmem [shape: f32[8,1], index: 1, kind: input, shape index: {}]
  %s2 = inlined_call_operand.hbm [shape: f32[8,256], index: 2, kind: output, shape index: {}]
  %s3 = sld [smem:[#allocation0]]
  $region22: #{tpu_custom_call.1} parent=0
    _
  %s5 = ssub.s32 1, %s3
  %s6 = scalar_select 0, %s5, %s3
  $region1: #{tpu_custom_call.1} parent=0
    #allocation2 [shape = 'u8[8192]{0}', space=vmem, size = 0x2000, scoped, tag = 'input window, operand 0, single buffered']
    #allocation3 [shape = 's32[1]{0}', space=sflag, size = 0x4, scoped, tag = 'scoped memory for tpu_custom_call.1']
    #allocation4 [shape = 's32[1]{0}', space=sflag, size = 0x4, scoped, tag = 'scoped memory for tpu_custom_call.1']
    #allocation5 [shape = 'u8[8192]{0}', space=vmem, size = 0x2000, scoped, tag = 'output window, operand 0, single buffered']
    %7 = vsyncpa [#allocation3], 0
    %8 = vsyncpa [#allocation4], 0
    // Predicated region
    $region2: #{tpu_custom_call.1} parent=1 // pred_check
      _
    $region3: #{tpu_custom_call.1} parent=1 // pred_check_branch
      %10 = sbr.rel (0) target = $region5
    $region4: #{tpu_custom_call.1} parent=1 // pred_region
      %s12 = ssub.s32 256, 256
      %13 = vsyncadd [#allocation3], %s12
      %s15 = sshll.u32 [#allocation2], 4
      %s16 = int_to_ptr.vmem [resolvable:$true] %s15
      %18 = dma.hbm_to_vmem [thread:$0]  %s0, 256, %s16, [#allocation3]
    $region5: #{tpu_custom_call.1} parent=1 // pred_fallthru
      _
    // Predicated region
    $region6: #{tpu_custom_call.1} parent=1 // pred_check
      _
    $region7: #{tpu_custom_call.1} parent=1 // pred_check_branch
      %20 = sbr.rel (0) target = $region9
    $region8: #{tpu_custom_call.1} parent=1 // pred_region
      _
    $region9: #{tpu_custom_call.1} parent=1 // pred_fallthru
      _
    // Predicated region
    $region10: #{tpu_custom_call.1} parent=1 // pred_check
      _
    $region11: #{tpu_custom_call.1} parent=1 // pred_check_branch
      %22 = sbr.rel (0) target = $region13
    $region12: #{tpu_custom_call.1} parent=1 // pred_region
      %23 = dma.done [#allocation3], 256
    $region13: #{tpu_custom_call.1} parent=1 // pred_fallthru
      _
    %v24 = vld [vmem:[#allocation2] sm:$0xff]
    %v25 = vld [vmem:[#allocation2 + $0x8] sm:$0xff]
    %v26 = vld [vmem:[%s1] sm:$0xff]
    %28 = vset.pattern.permute.xlu0 0
    %29 = vperm.xlu0 %28, %v26
    %v30 = vpop.permute.xlu0 %29
    %v32 = vadd.f32 %v24, %v30
    %v33 = vadd.f32 %v25, %v30
    %34 = vst [vmem:[#allocation5] sm:$0xff] %v32
    %35 = vst [vmem:[#allocation5 + $0x8] sm:$0xff] %v33
    // Predicated region
    $region14: #{tpu_custom_call.1} parent=1 // pred_check
      _
    $region15: #{tpu_custom_call.1} parent=1 // pred_check_branch
      %37 = sbr.rel (0) target = $region17
    $region16: #{tpu_custom_call.1} parent=1 // pred_region
      %s39 = ssub.s32 256, 256
      %40 = vsyncadd [#allocation4], %s39
      %s42 = sshll.u32 [#allocation5], 4
      %s43 = int_to_ptr.vmem [resolvable:$true] %s42
      %45 = dma.vmem_to_hbm [thread:$0]  %s43, 256, %s2, [#allocation4]
    $region17: #{tpu_custom_call.1} parent=1 // pred_fallthru
      _
    // Predicated region
    $region18: #{tpu_custom_call.1} parent=1 // pred_check
      _
    $region19: #{tpu_custom_call.1} parent=1 // pred_check_branch
      %47 = sbr.rel (0) target = $region21
    $region20: #{tpu_custom_call.1} parent=1 // pred_region
      %48 = dma.done [#allocation4], 256
    $region21: #{tpu_custom_call.1} parent=1 // pred_fallthru
      _
    %49 = vsyncpa [#allocation3], 1
    %50 = vsyncpa [#allocation4], 1

</llo_original>
